<compile_context>
chip_gen: v7x
topology: tpu7x:2x2x1
jax: 0.10.0
libtpu: 0.0.40
codegen_flags: <defaults>
</compile_context>

<pallas_src>
import functools

import jax
import jax.numpy as jnp
from jax.experimental import pallas as pl
from jax.experimental.pallas import tpu as pltpu

_MAX_ATOM_TYPE = 5

# irreps_node_embedding = '32x0e + 16x1e'  -> dim = 32 + 16*3 = 80
NUM_SCALAR = 32
NUM_VEC = 16
EMB_DIM = NUM_SCALAR + 3 * NUM_VEC          # 80
PACK_DIM = 128                              # lane-dense output slab width
MIN_TN = 256                                # tile clamp (multiple of 8)
MAX_TN = 1024                               # v5e + huge N: pass tn=2048 explicitly


def _round_up(x, m):
    return ((x + m - 1) // m) * m


def _pick_tile(n):
    """Node tile targeting ~8 grid steps (>=2 per v7x TensorCore + DMA/compute
    overlap), clamped to [256, 1024], multiple of 8.

    VMEM budget per 1024 rows is ~2x(out 512 KiB) + 2x(atom 512 KiB, the
    (tn,1) int32 block is lane-padded to 128 in VMEM) ~= 2 MiB — far below
    every generation's scoped VMEM at these caps; re-budget before pushing
    past ~4096 rows."""
    n8 = _round_up(max(int(n), 1), 8)
    t = _round_up(pl.cdiv(n8, 8), 8)
    return max(MIN_TN, min(t, MAX_TN))


# ---------------------------------------------------------------------------
# Kernel
# ---------------------------------------------------------------------------
def _node_embed_kernel(atom_ref, w_ref, out_ref):
    # atom_ref: (TN, 1)    int32
    # w_ref:    (5, 128)   f32   (bias folded into lanes 0:80, one-hot 80:85)
    # out_ref:  (TN, 128)  out_dtype
    w = w_ref[...]
    # One lane-broadcast, hoisted out of the select chain.
    atom_b = jnp.broadcast_to(atom_ref[...], out_ref.shape)          # (TN, 128)
    res = jnp.where(atom_b == 0, w[0:1, :], jnp.float32(0.0))
    for a in range(1, _MAX_ATOM_TYPE):
        res = jnp.where(atom_b == a, w[a:a + 1, :], res)
    # Padded / out-of-range rows select nothing -> all-zero row (sliced off).
    out_ref[...] = res.astype(out_ref.dtype)


# ---------------------------------------------------------------------------
# Host-side parameter packing (call once per parameter set)
# ---------------------------------------------------------------------------
def pack_params(weight_full, bias_full):
    """Fold the bias into each of the 5 weight rows and append the one-hot
    identity columns.  Result: (5, 128) f32 table, 2.5 KiB."""
    w = jnp.zeros((_MAX_ATOM_TYPE, PACK_DIM), jnp.float32)
    w = w.at[:, :EMB_DIM].set(
        weight_full.astype(jnp.float32) + bias_full.astype(jnp.float32)[None, :])
    w = w.at[:, EMB_DIM:EMB_DIM + _MAX_ATOM_TYPE].set(
        jnp.eye(_MAX_ATOM_TYPE, dtype=jnp.float32))
    return w


# ---------------------------------------------------------------------------
# Pallas wrappers
# ---------------------------------------------------------------------------
@functools.partial(jax.jit, static_argnames=("tn", "out_dtype"))
def node_embedding_packed(node_atom, w_packed, *, tn=None, out_dtype=jnp.float32):
    """Returns the lane-dense (n_pad, 128) slab:
    lanes [0:80] = embedding (bias included), [80:85] = one-hot, rest zero.
    Prefer this for downstream kernels (MXU carries the zero lanes for free)."""
    N = node_atom.shape[0]
    tile = _pick_tile(N) if tn is None else _round_up(int(tn), 8)
    n_pad = _round_up(N, tile)
    grid = n_pad // tile

    atom2d = node_atom.astype(jnp.int32).reshape(N, 1)
    if n_pad != N:
        # Pad with an invalid atom id (-1): padded rows become all-zero.
        atom2d = jnp.pad(atom2d, ((0, n_pad - N), (0, 0)), constant_values=-1)

    return pl.pallas_call(
        _node_embed_kernel,
        out_shape=jax.ShapeDtypeStruct((n_pad, PACK_DIM), out_dtype),
        grid_spec=pltpu.PrefetchScalarGridSpec(
            num_scalar_prefetch=0,
            grid=(grid,),
            in_specs=[
                pl.BlockSpec((tile, 1), lambda i: (i, 0)),
                pl.BlockSpec((_MAX_ATOM_TYPE, PACK_DIM), lambda i: (0, 0)),
            ],
            out_specs=pl.BlockSpec((tile, PACK_DIM), lambda i: (i, 0)),
        ),
        compiler_params=pltpu.CompilerParams(
            dimension_semantics=("parallel",)),
    )(atom2d, w_packed)


@functools.partial(jax.jit, static_argnames=("tn",))
def node_embedding_network(node_atom, w_packed, *, tn=None):
    """PyTorch-shaped outputs: (node_embedding [N,80], node_attr [N,5],
    node_atom_onehot [N,5]).  node_attr and node_atom_onehot alias the same
    array, matching the PyTorch return.

    If only the embedding is needed downstream, use node_embedding_packed()
    directly — the [:N, :80] slice here is an extra HBM copy when this
    function is the jit boundary."""
    N = node_atom.shape[0]
    slab = node_embedding_packed(node_atom, w_packed, tn=tn)
    emb = slab[:N, :EMB_DIM]
    # One-hot computed in XLA (N*5 floats) — cheaper than a narrow strided
    # slice out of the 128-lane slab.
    onehot = jax.nn.one_hot(node_atom, _MAX_ATOM_TYPE, dtype=jnp.float32)
    return emb, onehot, onehot


# ---------------------------------------------------------------------------
# Parameter construction mirroring NodeEmbeddingNetwork.__init__
# ---------------------------------------------------------------------------
def init_params(key):
    """LinearRS 0e->0e weight (fan-in normalized) scaled by sqrt(max_atom_type);
    bias only on scalar irreps (zero-init); 1e columns structurally zero."""
    w_scalar = (
        jax.random.normal(key, (_MAX_ATOM_TYPE, NUM_SCALAR), jnp.float32)
        / jnp.sqrt(jnp.float32(_MAX_ATOM_TYPE))
    ) * (_MAX_ATOM_TYPE ** 0.5)
    w_full = jnp.concatenate(
        [w_scalar, jnp.zeros((_MAX_ATOM_TYPE, EMB_DIM - NUM_SCALAR), jnp.float32)],
        axis=1)
    b_full = jnp.zeros((EMB_DIM,), jnp.float32)
    return w_full, b_full


if __name__ == "__main__":
    key = jax.random.PRNGKey(0)
    k_param, k_atom, k_bias = jax.random.split(key, 3)

    w_full, b_full = init_params(k_param)
    # Non-zero bias on the scalar channels to exercise the bias fold
    # (module init is zero, but the bias is a trainable parameter).
    b_full = b_full.at[:NUM_SCALAR].set(
        0.1 * jax.random.normal(k_bias, (NUM_SCALAR,), jnp.float32))

    w_packed = pack_params(w_full, b_full)   # host-side, once

    N = 200  # not a tile multiple -> exercises padding path
    node_atom = jax.random.randint(k_atom, (N,), 0, _MAX_ATOM_TYPE, dtype=jnp.int32)

    # Plain-JAX reference.
    ref_onehot = jax.nn.one_hot(node_atom, _MAX_ATOM_TYPE, dtype=jnp.float32)
    ref_emb = ref_onehot @ w_full + b_full

    # Default auto-tiled path.
    emb, attr, onehot = node_embedding_network(node_atom, w_packed)
    jax.block_until_ready((emb, attr, onehot))
    assert emb.shape == (N, EMB_DIM) and onehot.shape == (N, _MAX_ATOM_TYPE)
    assert jnp.allclose(onehot, ref_onehot)
    assert jnp.allclose(emb, ref_emb, atol=1e-5)

    # Multi-step grid + row-padding path (tn smaller than N, N % tn != 0).
    emb2, _, onehot2 = node_embedding_network(node_atom, w_packed, tn=64)
    jax.block_until_ready((emb2, onehot2))
    assert jnp.allclose(onehot2, ref_onehot)
    assert jnp.allclose(emb2, ref_emb, atol=1e-5)

    # Packed-slab path: embedding in lanes [0:80], one-hot in [80:85].
    slab = node_embedding_packed(node_atom, w_packed)
    jax.block_until_ready(slab)
    assert jnp.allclose(slab[:N, :EMB_DIM], ref_emb, atol=1e-5)
    assert jnp.allclose(slab[:N, EMB_DIM:EMB_DIM + _MAX_ATOM_TYPE], ref_onehot)

    # Optional bf16-writeback path (cast at store only; looser tolerance).
    slab_bf16 = node_embedding_packed(node_atom, w_packed, out_dtype=jnp.bfloat16)
    jax.block_until_ready(slab_bf16)
    assert slab_bf16.dtype == jnp.bfloat16
    assert jnp.allclose(slab_bf16[:N, :EMB_DIM].astype(jnp.float32), ref_emb,
                        atol=2e-2, rtol=2e-2)

    print("KERNEL_OK")
</pallas_src>

<mosaic_0001>
module attributes {stable_mosaic.version = 11 : i64} {
  func.func @_node_embed_kernel(%arg0: i32, %arg1: memref<256x1xi32, #tpu.memory_space<vmem>>, %arg2: memref<5x128xf32, #tpu.memory_space<vmem>>, %arg3: memref<256x128xf32, #tpu.memory_space<vmem>>) attributes {dimension_semantics = [#tpu.dimension_semantics<parallel>], iteration_bounds = array<i64: 1>, scalar_prefetch = 0 : i64, scratch_operands = 0 : i64, tpu.core_type = #tpu.core_type<tc>, window_params = [{transform_indices = @transform_0, window_bounds = array<i64: 256, 1>}, {pipeline_mode = #tpu.pipeline_mode<synchronous>, transform_indices = @transform_1, window_bounds = array<i64: 5, 128>}, {transform_indices = @transform_2, window_bounds = array<i64: 256, 128>}]} {
    %c0 = arith.constant 0 : index
    %c0_0 = arith.constant 0 : index
    %0 = vector.load %arg2[%c0, %c0_0] : memref<5x128xf32, #tpu.memory_space<vmem>>, vector<5x128xf32>
    %c0_1 = arith.constant 0 : index
    %c0_2 = arith.constant 0 : index
    %1 = vector.load %arg1[%c0_1, %c0_2] : memref<256x1xi32, #tpu.memory_space<vmem>>, vector<256x1xi32>
    %2 = vector.shape_cast %1 : vector<256x1xi32> to vector<256x1xi32>
    %3 = vector.broadcast %2 : vector<256x1xi32> to vector<256x128xi32>
    %c0_i32 = arith.constant 0 : i32
    %4 = vector.broadcast %c0_i32 : i32 to vector<256x128xi32>
    %5 = arith.cmpi eq, %3, %4 : vector<256x128xi32>
    %6 = vector.extract_strided_slice %0 {offsets = [0, 0], sizes = [1, 128], strides = [1, 1]} : vector<5x128xf32> to vector<1x128xf32>
    %cst = arith.constant 0.000000e+00 : f32
    %7 = vector.shape_cast %6 : vector<1x128xf32> to vector<1x128xf32>
    %8 = vector.broadcast %7 : vector<1x128xf32> to vector<256x128xf32>
    %9 = vector.broadcast %cst : f32 to vector<256x128xf32>
    %10 = arith.select %5, %8, %9 : vector<256x128xi1>, vector<256x128xf32>
    %c1_i32 = arith.constant 1 : i32
    %11 = vector.broadcast %c1_i32 : i32 to vector<256x128xi32>
    %12 = arith.cmpi eq, %3, %11 : vector<256x128xi32>
    %13 = vector.extract_strided_slice %0 {offsets = [1, 0], sizes = [1, 128], strides = [1, 1]} : vector<5x128xf32> to vector<1x128xf32>
    %14 = vector.shape_cast %13 : vector<1x128xf32> to vector<1x128xf32>
    %15 = vector.broadcast %14 : vector<1x128xf32> to vector<256x128xf32>
    %16 = arith.select %12, %15, %10 : vector<256x128xi1>, vector<256x128xf32>
    %c2_i32 = arith.constant 2 : i32
    %17 = vector.broadcast %c2_i32 : i32 to vector<256x128xi32>
    %18 = arith.cmpi eq, %3, %17 : vector<256x128xi32>
    %19 = vector.extract_strided_slice %0 {offsets = [2, 0], sizes = [1, 128], strides = [1, 1]} : vector<5x128xf32> to vector<1x128xf32>
    %20 = vector.shape_cast %19 : vector<1x128xf32> to vector<1x128xf32>
    %21 = vector.broadcast %20 : vector<1x128xf32> to vector<256x128xf32>
    %22 = arith.select %18, %21, %16 : vector<256x128xi1>, vector<256x128xf32>
    %c3_i32 = arith.constant 3 : i32
    %23 = vector.broadcast %c3_i32 : i32 to vector<256x128xi32>
    %24 = arith.cmpi eq, %3, %23 : vector<256x128xi32>
    %25 = vector.extract_strided_slice %0 {offsets = [3, 0], sizes = [1, 128], strides = [1, 1]} : vector<5x128xf32> to vector<1x128xf32>
    %26 = vector.shape_cast %25 : vector<1x128xf32> to vector<1x128xf32>
    %27 = vector.broadcast %26 : vector<1x128xf32> to vector<256x128xf32>
    %28 = arith.select %24, %27, %22 : vector<256x128xi1>, vector<256x128xf32>
    %c4_i32 = arith.constant 4 : i32
    %29 = vector.broadcast %c4_i32 : i32 to vector<256x128xi32>
    %30 = arith.cmpi eq, %3, %29 : vector<256x128xi32>
    %31 = vector.extract_strided_slice %0 {offsets = [4, 0], sizes = [1, 128], strides = [1, 1]} : vector<5x128xf32> to vector<1x128xf32>
    %32 = vector.shape_cast %31 : vector<1x128xf32> to vector<1x128xf32>
    %33 = vector.broadcast %32 : vector<1x128xf32> to vector<256x128xf32>
    %34 = arith.select %30, %33, %28 : vector<256x128xi1>, vector<256x128xf32>
    %c0_3 = arith.constant 0 : index
    %c0_4 = arith.constant 0 : index
    %35 = vector.load %arg3[%c0_3, %c0_4] : memref<256x128xf32, #tpu.memory_space<vmem>>, vector<256x128xf32>
    tpu.vector_store %arg3[%c0_3, %c0_4], %34 {strides = array<i32>} : memref<256x128xf32, #tpu.memory_space<vmem>>, vector<256x128xf32>,
    return
  }
  func.func @transform_0(%arg0: i32) -> (i32, i32) {
    %c0_i32 = arith.constant 0 : i32
    %c0_i32_0 = arith.constant 0 : i32
    return %arg0, %c0_i32 : i32, i32
  }
  func.func @transform_1(%arg0: i32) -> (i32, i32) {
    %c0_i32 = arith.constant 0 : i32
    %c0_i32_0 = arith.constant 0 : i32
    %c0_i32_1 = arith.constant 0 : i32
    return %c0_i32, %c0_i32_0 : i32, i32
  }
  func.func @transform_2(%arg0: i32) -> (i32, i32) {
    %c0_i32 = arith.constant 0 : i32
    %c0_i32_0 = arith.constant 0 : i32
    return %arg0, %c0_i32 : i32, i32
  }
}

</mosaic_0001>

<llo_original>
// kernel: node_embedding_packed.1
$region0: #{node_embedding_packed.1}
  #allocation0 [shape = 'u32[]', space=smem, size = 0x4, offset = 0x4, fixed_abs, tag = 'smem constant byte address 0x4 - core index']
  #allocation1 [shape = 'u32[144,128]{1,0:T(1,128)}', space=vmem, size = 0x12000, scoped, tag = 'internal scratch']
  %s0 = inlined_call_operand.vmem [shape: s32[256,1], index: 0, kind: input, shape index: {}]
  %s1 = inlined_call_operand.vmem [shape: f32[5,128], index: 1, kind: input, shape index: {}]
  %s2 = inlined_call_operand.hbm [shape: f32[256,128], index: 2, kind: output, shape index: {}]
  %s3 = sld [smem:[#allocation0]]
  $region18: #{node_embedding_packed.1} parent=0
    _
  %s5 = ssub.s32 1, %s3
  %s6 = scalar_select 0, %s5, %s3
  $region1: #{node_embedding_packed.1} parent=0
    #allocation2 [shape = 'u8[131072]{0}', space=vmem, size = 0x20000, scoped, tag = 'output window, operand 0, single buffered']
    #allocation3 [shape = 's32[1]{0}', space=sflag, size = 0x4, scoped, tag = 'scoped memory for node_embedding_packed.1']
    %7 = vsyncpa [#allocation3], 0
    // Predicated region
    $region2: #{node_embedding_packed.1} parent=1 // pred_check
      _
    $region3: #{node_embedding_packed.1} parent=1 // pred_check_branch
      %9 = sbr.rel (0) target = $region5
    $region4: #{node_embedding_packed.1} parent=1 // pred_region
      _
    $region5: #{node_embedding_packed.1} parent=1 // pred_fallthru
      _
    // Predicated region
    $region6: #{node_embedding_packed.1} parent=1 // pred_check
      _
    $region7: #{node_embedding_packed.1} parent=1 // pred_check_branch
      %11 = sbr.rel (0) target = $region9
    $region8: #{node_embedding_packed.1} parent=1 // pred_region
      _
    $region9: #{node_embedding_packed.1} parent=1 // pred_fallthru
      _
    %v12 = vld [vmem:[%s1] sm:$0x1f]
    %v13 = vld [vmem:[%s0] sm:$0xff]
    %v14 = vld [vmem:[%s0 + $0x8] sm:$0xff]
    %v15 = vld [vmem:[%s0 + $0x10] sm:$0xff]
    %v16 = vld [vmem:[%s0 + $0x18] sm:$0xff]
    %v17 = vld [vmem:[%s0 + $0x20] sm:$0xff]
    %v18 = vld [vmem:[%s0 + $0x28] sm:$0xff]
    %v19 = vld [vmem:[%s0 + $0x30] sm:$0xff]
    %v20 = vld [vmem:[%s0 + $0x38] sm:$0xff]
    %v21 = vld [vmem:[%s0 + $0x40] sm:$0xff]
    %v22 = vld [vmem:[%s0 + $0x48] sm:$0xff]
    %v23 = vld [vmem:[%s0 + $0x50] sm:$0xff]
    %v24 = vld [vmem:[%s0 + $0x58] sm:$0xff]
    %v25 = vld [vmem:[%s0 + $0x60] sm:$0xff]
    %v26 = vld [vmem:[%s0 + $0x68] sm:$0xff]
    %v27 = vld [vmem:[%s0 + $0x70] sm:$0xff]
    %v28 = vld [vmem:[%s0 + $0x78] sm:$0xff]
    %v29 = vld [vmem:[%s0 + $0x80] sm:$0xff]
    %v30 = vld [vmem:[%s0 + $0x88] sm:$0xff]
    %v31 = vld [vmem:[%s0 + $0x90] sm:$0xff]
    %v32 = vld [vmem:[%s0 + $0x98] sm:$0xff]
    %v33 = vld [vmem:[%s0 + $0xa0] sm:$0xff]
    %v34 = vld [vmem:[%s0 + $0xa8] sm:$0xff]
    %v35 = vld [vmem:[%s0 + $0xb0] sm:$0xff]
    %v36 = vld [vmem:[%s0 + $0xb8] sm:$0xff]
    %v37 = vld [vmem:[%s0 + $0xc0] sm:$0xff]
    %v38 = vld [vmem:[%s0 + $0xc8] sm:$0xff]
    %v39 = vld [vmem:[%s0 + $0xd0] sm:$0xff]
    %v40 = vld [vmem:[%s0 + $0xd8] sm:$0xff]
    %v41 = vld [vmem:[%s0 + $0xe0] sm:$0xff]
    %v42 = vld [vmem:[%s0 + $0xe8] sm:$0xff]
    %v43 = vld [vmem:[%s0 + $0xf0] sm:$0xff]
    %v44 = vld [vmem:[%s0 + $0xf8] sm:$0xff]
    %45 = vset.pattern.permute.xlu0 0
    %46 = vperm.xlu0 %45, %v13
    %v47 = vpop.permute.xlu0 %46
    %48 = vset.pattern.permute.xlu0 0
    %49 = vperm.xlu0 %48, %v14
    %v50 = vpop.permute.xlu0 %49
    %51 = vset.pattern.permute.xlu0 0
    %52 = vperm.xlu0 %51, %v15
    %v53 = vpop.permute.xlu0 %52
    %54 = vset.pattern.permute.xlu0 0
    %55 = vperm.xlu0 %54, %v16
    %v56 = vpop.permute.xlu0 %55
    %57 = vset.pattern.permute.xlu0 0
    %58 = vperm.xlu0 %57, %v17
    %v59 = vpop.permute.xlu0 %58
    %60 = vset.pattern.permute.xlu0 0
    %61 = vperm.xlu0 %60, %v18
    %v62 = vpop.permute.xlu0 %61
    %63 = vset.pattern.permute.xlu0 0
    %64 = vperm.xlu0 %63, %v19
    %v65 = vpop.permute.xlu0 %64
    %66 = vset.pattern.permute.xlu0 0
    %67 = vperm.xlu0 %66, %v20
    %v68 = vpop.permute.xlu0 %67
    %69 = vset.pattern.permute.xlu0 0
    %70 = vperm.xlu0 %69, %v21
    %v71 = vpop.permute.xlu0 %70
    %72 = vset.pattern.permute.xlu0 0
    %73 = vperm.xlu0 %72, %v22
    %v74 = vpop.permute.xlu0 %73
    %75 = vset.pattern.permute.xlu0 0
    %76 = vperm.xlu0 %75, %v23
    %v77 = vpop.permute.xlu0 %76
    %78 = vset.pattern.permute.xlu0 0
    %79 = vperm.xlu0 %78, %v24
    %v80 = vpop.permute.xlu0 %79
    %81 = vset.pattern.permute.xlu0 0
    %82 = vperm.xlu0 %81, %v25
    %v83 = vpop.permute.xlu0 %82
    %84 = vset.pattern.permute.xlu0 0
    %85 = vperm.xlu0 %84, %v26
    %v86 = vpop.permute.xlu0 %85
    %87 = vset.pattern.permute.xlu0 0
    %88 = vperm.xlu0 %87, %v27
    %v89 = vpop.permute.xlu0 %88
    %90 = vset.pattern.permute.xlu0 0
    %91 = vperm.xlu0 %90, %v28
    %v92 = vpop.permute.xlu0 %91
    %93 = vset.pattern.permute.xlu0 0
    %94 = vperm.xlu0 %93, %v29
    %v95 = vpop.permute.xlu0 %94
    %96 = vset.pattern.permute.xlu0 0
    %97 = vperm.xlu0 %96, %v30
    %v98 = vpop.permute.xlu0 %97
    %99 = vset.pattern.permute.xlu0 0
    %100 = vperm.xlu0 %99, %v31
    %v101 = vpop.permute.xlu0 %100
    %102 = vset.pattern.permute.xlu0 0
    %103 = vperm.xlu0 %102, %v32
    %v104 = vpop.permute.xlu0 %103
    %105 = vset.pattern.permute.xlu0 0
    %106 = vperm.xlu0 %105, %v33
    %v107 = vpop.permute.xlu0 %106
    %108 = vset.pattern.permute.xlu0 0
    %109 = vperm.xlu0 %108, %v34
    %v110 = vpop.permute.xlu0 %109
    %111 = vset.pattern.permute.xlu0 0
    %112 = vperm.xlu0 %111, %v35
    %v113 = vpop.permute.xlu0 %112
    %114 = vset.pattern.permute.xlu0 0
    %115 = vperm.xlu0 %114, %v36
    %v116 = vpop.permute.xlu0 %115
    %117 = vset.pattern.permute.xlu0 0
    %118 = vperm.xlu0 %117, %v37
    %v119 = vpop.permute.xlu0 %118
    %120 = vset.pattern.permute.xlu0 0
    %121 = vperm.xlu0 %120, %v38
    %v122 = vpop.permute.xlu0 %121
    %123 = vset.pattern.permute.xlu0 0
    %124 = vperm.xlu0 %123, %v39
    %v125 = vpop.permute.xlu0 %124
    %126 = vset.pattern.permute.xlu0 0
    %127 = vperm.xlu0 %126, %v40
    %v128 = vpop.permute.xlu0 %127
    %129 = vset.pattern.permute.xlu0 0
    %130 = vperm.xlu0 %129, %v41
    %v131 = vpop.permute.xlu0 %130
    %132 = vset.pattern.permute.xlu0 0
    %133 = vperm.xlu0 %132, %v42
    %v134 = vpop.permute.xlu0 %133
    %135 = vset.pattern.permute.xlu0 0
    %136 = vperm.xlu0 %135, %v43
    %v137 = vpop.permute.xlu0 %136
    %138 = vset.pattern.permute.xlu0 0
    %139 = vperm.xlu0 %138, %v44
    %v140 = vpop.permute.xlu0 %139
    %vm141 = vcmp.eq.s32.totalorder %v47, 0
    %vm142 = vcmp.eq.s32.totalorder %v50, 0
    %vm143 = vcmp.eq.s32.totalorder %v53, 0
    %vm144 = vcmp.eq.s32.totalorder %v56, 0
    %vm145 = vcmp.eq.s32.totalorder %v59, 0
    %vm146 = vcmp.eq.s32.totalorder %v62, 0
    %vm147 = vcmp.eq.s32.totalorder %v65, 0
    %vm148 = vcmp.eq.s32.totalorder %v68, 0
    %vm149 = vcmp.eq.s32.totalorder %v71, 0
    %vm150 = vcmp.eq.s32.totalorder %v74, 0
    %vm151 = vcmp.eq.s32.totalorder %v77, 0
    %vm152 = vcmp.eq.s32.totalorder %v80, 0
    %vm153 = vcmp.eq.s32.totalorder %v83, 0
    %vm154 = vcmp.eq.s32.totalorder %v86, 0
    %vm155 = vcmp.eq.s32.totalorder %v89, 0
    %vm156 = vcmp.eq.s32.totalorder %v92, 0
    %vm157 = vcmp.eq.s32.totalorder %v95, 0
    %vm158 = vcmp.eq.s32.totalorder %v98, 0
    %vm159 = vcmp.eq.s32.totalorder %v101, 0
    %vm160 = vcmp.eq.s32.totalorder %v104, 0
    %vm161 = vcmp.eq.s32.totalorder %v107, 0
    %vm162 = vcmp.eq.s32.totalorder %v110, 0
    %vm163 = vcmp.eq.s32.totalorder %v113, 0
    %vm164 = vcmp.eq.s32.totalorder %v116, 0
    %vm165 = vcmp.eq.s32.totalorder %v119, 0
    %vm166 = vcmp.eq.s32.totalorder %v122, 0
    %vm167 = vcmp.eq.s32.totalorder %v125, 0
    %vm168 = vcmp.eq.s32.totalorder %v128, 0
    %vm169 = vcmp.eq.s32.totalorder %v131, 0
    %vm170 = vcmp.eq.s32.totalorder %v134, 0
    %vm171 = vcmp.eq.s32.totalorder %v137, 0
    %vm172 = vcmp.eq.s32.totalorder %v140, 0
    %v173 = vlaneseq
    %v174 = vshrl.u32 %v173, 7
    %v175 = vsub.s32 0, %v174
    %v176 = vrot.slane %v12, %v175
    %v177 = vsel %vm141, %v176, 0.0
    %v178 = vsel %vm142, %v176, 0.0
    %v179 = vsel %vm143, %v176, 0.0
    %v180 = vsel %vm144, %v176, 0.0
    %v181 = vsel %vm145, %v176, 0.0
    %v182 = vsel %vm146, %v176, 0.0
    %v183 = vsel %vm147, %v176, 0.0
    %v184 = vsel %vm148, %v176, 0.0
    %v185 = vsel %vm149, %v176, 0.0
    %v186 = vsel %vm150, %v176, 0.0
    %v187 = vsel %vm151, %v176, 0.0
    %v188 = vsel %vm152, %v176, 0.0
    %v189 = vsel %vm153, %v176, 0.0
    %v190 = vsel %vm154, %v176, 0.0
    %v191 = vsel %vm155, %v176, 0.0
    %v192 = vsel %vm156, %v176, 0.0
    %v193 = vsel %vm157, %v176, 0.0
    %v194 = vsel %vm158, %v176, 0.0
    %v195 = vsel %vm159, %v176, 0.0
    %v196 = vsel %vm160, %v176, 0.0
    %v197 = vsel %vm161, %v176, 0.0
    %v198 = vsel %vm162, %v176, 0.0
    %v199 = vsel %vm163, %v176, 0.0
    %v200 = vsel %vm164, %v176, 0.0
    %v201 = vsel %vm165, %v176, 0.0
    %v202 = vsel %vm166, %v176, 0.0
    %v203 = vsel %vm167, %v176, 0.0
    %v204 = vsel %vm168, %v176, 0.0
    %v205 = vsel %vm169, %v176, 0.0
    %v206 = vsel %vm170, %v176, 0.0
    %v207 = vsel %vm171, %v176, 0.0
    %v208 = vsel %vm172, %v176, 0.0
    %vm209 = vcmp.eq.s32.totalorder %v47, 1
    %vm210 = vcmp.eq.s32.totalorder %v50, 1
    %vm211 = vcmp.eq.s32.totalorder %v53, 1
    %vm212 = vcmp.eq.s32.totalorder %v56, 1
    %vm213 = vcmp.eq.s32.totalorder %v59, 1
    %vm214 = vcmp.eq.s32.totalorder %v62, 1
    %vm215 = vcmp.eq.s32.totalorder %v65, 1
    %vm216 = vcmp.eq.s32.totalorder %v68, 1
    %vm217 = vcmp.eq.s32.totalorder %v71, 1
    %vm218 = vcmp.eq.s32.totalorder %v74, 1
    %vm219 = vcmp.eq.s32.totalorder %v77, 1
    %vm220 = vcmp.eq.s32.totalorder %v80, 1
    %vm221 = vcmp.eq.s32.totalorder %v83, 1
    %vm222 = vcmp.eq.s32.totalorder %v86, 1
    %vm223 = vcmp.eq.s32.totalorder %v89, 1
    %vm224 = vcmp.eq.s32.totalorder %v92, 1
    %vm225 = vcmp.eq.s32.totalorder %v95, 1
    %vm226 = vcmp.eq.s32.totalorder %v98, 1
    %vm227 = vcmp.eq.s32.totalorder %v101, 1
    %vm228 = vcmp.eq.s32.totalorder %v104, 1
    %vm229 = vcmp.eq.s32.totalorder %v107, 1
    %vm230 = vcmp.eq.s32.totalorder %v110, 1
    %vm231 = vcmp.eq.s32.totalorder %v113, 1
    %vm232 = vcmp.eq.s32.totalorder %v116, 1
    %vm233 = vcmp.eq.s32.totalorder %v119, 1
    %vm234 = vcmp.eq.s32.totalorder %v122, 1
    %vm235 = vcmp.eq.s32.totalorder %v125, 1
    %vm236 = vcmp.eq.s32.totalorder %v128, 1
    %vm237 = vcmp.eq.s32.totalorder %v131, 1
    %vm238 = vcmp.eq.s32.totalorder %v134, 1
    %vm239 = vcmp.eq.s32.totalorder %v137, 1
    %vm240 = vcmp.eq.s32.totalorder %v140, 1
    %v241 = vlaneseq
    %v242 = vshrl.u32 %v241, 7
    %v243 = vsub.s32 1, %v242
    %v244 = vrot.slane %v12, %v243
    %v245 = vsel %vm209, %v244, %v177
    %v246 = vsel %vm210, %v244, %v178
    %v247 = vsel %vm211, %v244, %v179
    %v248 = vsel %vm212, %v244, %v180
    %v249 = vsel %vm213, %v244, %v181
    %v250 = vsel %vm214, %v244, %v182
    %v251 = vsel %vm215, %v244, %v183
    %v252 = vsel %vm216, %v244, %v184
    %v253 = vsel %vm217, %v244, %v185
    %v254 = vsel %vm218, %v244, %v186
    %v255 = vsel %vm219, %v244, %v187
    %v256 = vsel %vm220, %v244, %v188
    %v257 = vsel %vm221, %v244, %v189
    %v258 = vsel %vm222, %v244, %v190
    %v259 = vsel %vm223, %v244, %v191
    %v260 = vsel %vm224, %v244, %v192
    %v261 = vsel %vm225, %v244, %v193
    %v262 = vsel %vm226, %v244, %v194
    %v263 = vsel %vm227, %v244, %v195
    %v264 = vsel %vm228, %v244, %v196
    %v265 = vsel %vm229, %v244, %v197
    %v266 = vsel %vm230, %v244, %v198
    %v267 = vsel %vm231, %v244, %v199
    %v268 = vsel %vm232, %v244, %v200
    %v269 = vsel %vm233, %v244, %v201
    %v270 = vsel %vm234, %v244, %v202
    %v271 = vsel %vm235, %v244, %v203
    %v272 = vsel %vm236, %v244, %v204
    %v273 = vsel %vm237, %v244, %v205
    %v274 = vsel %vm238, %v244, %v206
    %v275 = vsel %vm239, %v244, %v207
    %v276 = vsel %vm240, %v244, %v208
    %vm277 = vcmp.eq.s32.totalorder %v47, 2
    %vm278 = vcmp.eq.s32.totalorder %v50, 2
    %vm279 = vcmp.eq.s32.totalorder %v53, 2
    %vm280 = vcmp.eq.s32.totalorder %v56, 2
    %vm281 = vcmp.eq.s32.totalorder %v59, 2
    %vm282 = vcmp.eq.s32.totalorder %v62, 2
    %vm283 = vcmp.eq.s32.totalorder %v65, 2
    %vm284 = vcmp.eq.s32.totalorder %v68, 2
    %vm285 = vcmp.eq.s32.totalorder %v71, 2
    %vm286 = vcmp.eq.s32.totalorder %v74, 2
    %vm287 = vcmp.eq.s32.totalorder %v77, 2
    %vm288 = vcmp.eq.s32.totalorder %v80, 2
    %vm289 = vcmp.eq.s32.totalorder %v83, 2
    %vm290 = vcmp.eq.s32.totalorder %v86, 2
    %vm291 = vcmp.eq.s32.totalorder %v89, 2
    %vm292 = vcmp.eq.s32.totalorder %v92, 2
    %vm293 = vcmp.eq.s32.totalorder %v95, 2
    %vm294 = vcmp.eq.s32.totalorder %v98, 2
    %vm295 = vcmp.eq.s32.totalorder %v101, 2
    %vm296 = vcmp.eq.s32.totalorder %v104, 2
    %vm297 = vcmp.eq.s32.totalorder %v107, 2
    %vm298 = vcmp.eq.s32.totalorder %v110, 2
    %vm299 = vcmp.eq.s32.totalorder %v113, 2
    %vm300 = vcmp.eq.s32.totalorder %v116, 2
    %vm301 = vcmp.eq.s32.totalorder %v119, 2
    %vm302 = vcmp.eq.s32.totalorder %v122, 2
    %vm303 = vcmp.eq.s32.totalorder %v125, 2
    %vm304 = vcmp.eq.s32.totalorder %v128, 2
    %vm305 = vcmp.eq.s32.totalorder %v131, 2
    %vm306 = vcmp.eq.s32.totalorder %v134, 2
    %vm307 = vcmp.eq.s32.totalorder %v137, 2
    %vm308 = vcmp.eq.s32.totalorder %v140, 2
    %v309 = vlaneseq
    %v310 = vshrl.u32 %v309, 7
    %v311 = vsub.s32 2, %v310
    %v312 = vrot.slane %v12, %v311
    %v313 = vsel %vm277, %v312, %v245
    %v314 = vsel %vm278, %v312, %v246
    %v315 = vsel %vm279, %v312, %v247
    %v316 = vsel %vm280, %v312, %v248
    %v317 = vsel %vm281, %v312, %v249
    %v318 = vsel %vm282, %v312, %v250
    %v319 = vsel %vm283, %v312, %v251
    %v320 = vsel %vm284, %v312, %v252
    %v321 = vsel %vm285, %v312, %v253
    %v322 = vsel %vm286, %v312, %v254
    %v323 = vsel %vm287, %v312, %v255
    %v324 = vsel %vm288, %v312, %v256
    %v325 = vsel %vm289, %v312, %v257
    %v326 = vsel %vm290, %v312, %v258
    %v327 = vsel %vm291, %v312, %v259
    %v328 = vsel %vm292, %v312, %v260
    %v329 = vsel %vm293, %v312, %v261
    %v330 = vsel %vm294, %v312, %v262
    %v331 = vsel %vm295, %v312, %v263
    %v332 = vsel %vm296, %v312, %v264
    %v333 = vsel %vm297, %v312, %v265
    %v334 = vsel %vm298, %v312, %v266
    %v335 = vsel %vm299, %v312, %v267
    %v336 = vsel %vm300, %v312, %v268
    %v337 = vsel %vm301, %v312, %v269
    %v338 = vsel %vm302, %v312, %v270
    %v339 = vsel %vm303, %v312, %v271
    %v340 = vsel %vm304, %v312, %v272
    %v341 = vsel %vm305, %v312, %v273
    %v342 = vsel %vm306, %v312, %v274
    %v343 = vsel %vm307, %v312, %v275
    %v344 = vsel %vm308, %v312, %v276
    %vm345 = vcmp.eq.s32.totalorder %v47, 3
    %vm346 = vcmp.eq.s32.totalorder %v50, 3
    %vm347 = vcmp.eq.s32.totalorder %v53, 3
    %vm348 = vcmp.eq.s32.totalorder %v56, 3
    %vm349 = vcmp.eq.s32.totalorder %v59, 3
    %vm350 = vcmp.eq.s32.totalorder %v62, 3
    %vm351 = vcmp.eq.s32.totalorder %v65, 3
    %vm352 = vcmp.eq.s32.totalorder %v68, 3
    %vm353 = vcmp.eq.s32.totalorder %v71, 3
    %vm354 = vcmp.eq.s32.totalorder %v74, 3
    %vm355 = vcmp.eq.s32.totalorder %v77, 3
    %vm356 = vcmp.eq.s32.totalorder %v80, 3
    %vm357 = vcmp.eq.s32.totalorder %v83, 3
    %vm358 = vcmp.eq.s32.totalorder %v86, 3
    %vm359 = vcmp.eq.s32.totalorder %v89, 3
    %vm360 = vcmp.eq.s32.totalorder %v92, 3
    %vm361 = vcmp.eq.s32.totalorder %v95, 3
    %vm362 = vcmp.eq.s32.totalorder %v98, 3
    %vm363 = vcmp.eq.s32.totalorder %v101, 3
    %vm364 = vcmp.eq.s32.totalorder %v104, 3
    %vm365 = vcmp.eq.s32.totalorder %v107, 3
    %vm366 = vcmp.eq.s32.totalorder %v110, 3
    %vm367 = vcmp.eq.s32.totalorder %v113, 3
    %vm368 = vcmp.eq.s32.totalorder %v116, 3
    %vm369 = vcmp.eq.s32.totalorder %v119, 3
    %vm370 = vcmp.eq.s32.totalorder %v122, 3
    %vm371 = vcmp.eq.s32.totalorder %v125, 3
    %vm372 = vcmp.eq.s32.totalorder %v128, 3
    %vm373 = vcmp.eq.s32.totalorder %v131, 3
    %vm374 = vcmp.eq.s32.totalorder %v134, 3
    %vm375 = vcmp.eq.s32.totalorder %v137, 3
    %vm376 = vcmp.eq.s32.totalorder %v140, 3
    %v377 = vlaneseq
    %v378 = vshrl.u32 %v377, 7
    %v379 = vsub.s32 3, %v378
    %v380 = vrot.slane %v12, %v379
    %v381 = vsel %vm345, %v380, %v313
    %v382 = vsel %vm346, %v380, %v314
    %v383 = vsel %vm347, %v380, %v315
    %v384 = vsel %vm348, %v380, %v316
    %v385 = vsel %vm349, %v380, %v317
    %v386 = vsel %vm350, %v380, %v318
    %v387 = vsel %vm351, %v380, %v319
    %v388 = vsel %vm352, %v380, %v320
    %v389 = vsel %vm353, %v380, %v321
    %v390 = vsel %vm354, %v380, %v322
    %v391 = vsel %vm355, %v380, %v323
    %v392 = vsel %vm356, %v380, %v324
    %v393 = vsel %vm357, %v380, %v325
    %v394 = vsel %vm358, %v380, %v326
    %v395 = vsel %vm359, %v380, %v327
    %v396 = vsel %vm360, %v380, %v328
    %v397 = vsel %vm361, %v380, %v329
    %v398 = vsel %vm362, %v380, %v330
    %v399 = vsel %vm363, %v380, %v331
    %v400 = vsel %vm364, %v380, %v332
    %v401 = vsel %vm365, %v380, %v333
    %v402 = vsel %vm366, %v380, %v334
    %v403 = vsel %vm367, %v380, %v335
    %v404 = vsel %vm368, %v380, %v336
    %v405 = vsel %vm369, %v380, %v337
    %v406 = vsel %vm370, %v380, %v338
    %v407 = vsel %vm371, %v380, %v339
    %v408 = vsel %vm372, %v380, %v340
    %v409 = vsel %vm373, %v380, %v341
    %v410 = vsel %vm374, %v380, %v342
    %v411 = vsel %vm375, %v380, %v343
    %v412 = vsel %vm376, %v380, %v344
    %vm413 = vcmp.eq.s32.totalorder %v47, 4
    %vm414 = vcmp.eq.s32.totalorder %v50, 4
    %vm415 = vcmp.eq.s32.totalorder %v53, 4
    %vm416 = vcmp.eq.s32.totalorder %v56, 4
    %vm417 = vcmp.eq.s32.totalorder %v59, 4
    %vm418 = vcmp.eq.s32.totalorder %v62, 4
    %vm419 = vcmp.eq.s32.totalorder %v65, 4
    %vm420 = vcmp.eq.s32.totalorder %v68, 4
    %vm421 = vcmp.eq.s32.totalorder %v71, 4
    %vm422 = vcmp.eq.s32.totalorder %v74, 4
    %vm423 = vcmp.eq.s32.totalorder %v77, 4
    %vm424 = vcmp.eq.s32.totalorder %v80, 4
    %vm425 = vcmp.eq.s32.totalorder %v83, 4
    %vm426 = vcmp.eq.s32.totalorder %v86, 4
    %vm427 = vcmp.eq.s32.totalorder %v89, 4
    %vm428 = vcmp.eq.s32.totalorder %v92, 4
    %vm429 = vcmp.eq.s32.totalorder %v95, 4
    %vm430 = vcmp.eq.s32.totalorder %v98, 4
    %vm431 = vcmp.eq.s32.totalorder %v101, 4
    %vm432 = vcmp.eq.s32.totalorder %v104, 4
    %vm433 = vcmp.eq.s32.totalorder %v107, 4
    %vm434 = vcmp.eq.s32.totalorder %v110, 4
    %vm435 = vcmp.eq.s32.totalorder %v113, 4
    %vm436 = vcmp.eq.s32.totalorder %v116, 4
    %vm437 = vcmp.eq.s32.totalorder %v119, 4
    %vm438 = vcmp.eq.s32.totalorder %v122, 4
    %vm439 = vcmp.eq.s32.totalorder %v125, 4
    %vm440 = vcmp.eq.s32.totalorder %v128, 4
    %vm441 = vcmp.eq.s32.totalorder %v131, 4
    %vm442 = vcmp.eq.s32.totalorder %v134, 4
    %vm443 = vcmp.eq.s32.totalorder %v137, 4
    %vm444 = vcmp.eq.s32.totalorder %v140, 4
    %v445 = vlaneseq
    %v446 = vshrl.u32 %v445, 7
    %v447 = vsub.s32 4, %v446
    %v448 = vrot.slane %v12, %v447
    %v449 = vsel %vm413, %v448, %v381
    %v450 = vsel %vm414, %v448, %v382
    %v451 = vsel %vm415, %v448, %v383
    %v452 = vsel %vm416, %v448, %v384
    %v453 = vsel %vm417, %v448, %v385
    %v454 = vsel %vm418, %v448, %v386
    %v455 = vsel %vm419, %v448, %v387
    %v456 = vsel %vm420, %v448, %v388
    %v457 = vsel %vm421, %v448, %v389
    %v458 = vsel %vm422, %v448, %v390
    %v459 = vsel %vm423, %v448, %v391
    %v460 = vsel %vm424, %v448, %v392
    %v461 = vsel %vm425, %v448, %v393
    %v462 = vsel %vm426, %v448, %v394
    %v463 = vsel %vm427, %v448, %v395
    %v464 = vsel %vm428, %v448, %v396
    %v465 = vsel %vm429, %v448, %v397
    %v466 = vsel %vm430, %v448, %v398
    %v467 = vsel %vm431, %v448, %v399
    %v468 = vsel %vm432, %v448, %v400
    %v469 = vsel %vm433, %v448, %v401
    %v470 = vsel %vm434, %v448, %v402
    %v471 = vsel %vm435, %v448, %v403
    %v472 = vsel %vm436, %v448, %v404
    %v473 = vsel %vm437, %v448, %v405
    %v474 = vsel %vm438, %v448, %v406
    %v475 = vsel %vm439, %v448, %v407
    %v476 = vsel %vm440, %v448, %v408
    %v477 = vsel %vm441, %v448, %v409
    %v478 = vsel %vm442, %v448, %v410
    %v479 = vsel %vm443, %v448, %v411
    %v480 = vsel %vm444, %v448, %v412
    %481 = vst [vmem:[#allocation2] sm:$0xff] %v449
    %482 = vst [vmem:[#allocation2 + $0x8] sm:$0xff] %v450
    %483 = vst [vmem:[#allocation2 + $0x10] sm:$0xff] %v451
    %484 = vst [vmem:[#allocation2 + $0x18] sm:$0xff] %v452
    %485 = vst [vmem:[#allocation2 + $0x20] sm:$0xff] %v453
    %486 = vst [vmem:[#allocation2 + $0x28] sm:$0xff] %v454
    %487 = vst [vmem:[#allocation2 + $0x30] sm:$0xff] %v455
    %488 = vst [vmem:[#allocation2 + $0x38] sm:$0xff] %v456
    %489 = vst [vmem:[#allocation2 + $0x40] sm:$0xff] %v457
    %490 = vst [vmem:[#allocation2 + $0x48] sm:$0xff] %v458
    %491 = vst [vmem:[#allocation2 + $0x50] sm:$0xff] %v459
    %492 = vst [vmem:[#allocation2 + $0x58] sm:$0xff] %v460
    %493 = vst [vmem:[#allocation2 + $0x60] sm:$0xff] %v461
    %494 = vst [vmem:[#allocation2 + $0x68] sm:$0xff] %v462
    %495 = vst [vmem:[#allocation2 + $0x70] sm:$0xff] %v463
    %496 = vst [vmem:[#allocation2 + $0x78] sm:$0xff] %v464
    %497 = vst [vmem:[#allocation2 + $0x80] sm:$0xff] %v465
    %498 = vst [vmem:[#allocation2 + $0x88] sm:$0xff] %v466
    %499 = vst [vmem:[#allocation2 + $0x90] sm:$0xff] %v467
    %500 = vst [vmem:[#allocation2 + $0x98] sm:$0xff] %v468
    %501 = vst [vmem:[#allocation2 + $0xa0] sm:$0xff] %v469
    %502 = vst [vmem:[#allocation2 + $0xa8] sm:$0xff] %v470
    %503 = vst [vmem:[#allocation2 + $0xb0] sm:$0xff] %v471
    %504 = vst [vmem:[#allocation2 + $0xb8] sm:$0xff] %v472
    %505 = vst [vmem:[#allocation2 + $0xc0] sm:$0xff] %v473
    %506 = vst [vmem:[#allocation2 + $0xc8] sm:$0xff] %v474
    %507 = vst [vmem:[#allocation2 + $0xd0] sm:$0xff] %v475
    %508 = vst [vmem:[#allocation2 + $0xd8] sm:$0xff] %v476
    %509 = vst [vmem:[#allocation2 + $0xe0] sm:$0xff] %v477
    %510 = vst [vmem:[#allocation2 + $0xe8] sm:$0xff] %v478
    %511 = vst [vmem:[#allocation2 + $0xf0] sm:$0xff] %v479
    %512 = vst [vmem:[#allocation2 + $0xf8] sm:$0xff] %v480
    // Predicated region
    $region10: #{node_embedding_packed.1} parent=1 // pred_check
      _
    $region11: #{node_embedding_packed.1} parent=1 // pred_check_branch
      %514 = sbr.rel (0) target = $region13
    $region12: #{node_embedding_packed.1} parent=1 // pred_region
      %s516 = ssub.s32 4096, 4096
      %517 = vsyncadd [#allocation3], %s516
      %s518 = sshll.u32 [#allocation2], 4
      %s519 = int_to_ptr.vmem [resolvable:$true] %s518
      %524 = dma.vmem_to_hbm [thread:$0]  %s519, 4096, %s2, [#allocation3], 128, 128, 8
    $region13: #{node_embedding_packed.1} parent=1 // pred_fallthru
      _
    // Predicated region
    $region14: #{node_embedding_packed.1} parent=1 // pred_check
      _
    $region15: #{node_embedding_packed.1} parent=1 // pred_check_branch
      %526 = sbr.rel (0) target = $region17
    $region16: #{node_embedding_packed.1} parent=1 // pred_region
      %527 = dma.done [#allocation3], 4096
    $region17: #{node_embedding_packed.1} parent=1 // pred_fallthru
      _
    %528 = vsyncpa [#allocation3], 1

</llo_original>
